<compile_context>
chip_gen: v7x
topology: tpu7x:2x2x1
jax: 0.10.0
libtpu: 0.0.40
codegen_flags: <defaults>
</compile_context>

<pallas_src>
import jax
import jax.numpy as jnp
from jax.experimental import pallas as pl
from jax.experimental.pallas import tpu as pltpu

BN_EPS = 1e-5
TILE_B_MAX = 1024  # batch rows per grid step (well under VMEM even on v7x's 64 MiB)


def _round_up(n, m):
    return ((n + m - 1) // m) * m


# --------------------------- Pallas kernels ----------------------------------

def bn_stats_kernel(x_ref, sum_ref, sumsq_ref):
    """Accumulate per-feature sum and sum-of-squares over batch tiles."""
    @pl.when(pl.program_id(0) == 0)
    def _():
        sum_ref[...] = jnp.zeros_like(sum_ref)
        sumsq_ref[...] = jnp.zeros_like(sumsq_ref)

    x = x_ref[...]                                        # (TILE_B, D) f32
    sum_ref[...] += jnp.sum(x, axis=0, keepdims=True)     # (1, D)
    sumsq_ref[...] += jnp.sum(x * x, axis=0, keepdims=True)


def mu_mlp_kernel(clip_ref, x_ref, w1_ref, b1_ref, w2_ref, b2_ref,
                  w3_ref, b3_ref, out_ref):
    """Fused (BN-folded) Linear->ReLU->Linear->ReLU->Linear->clip*tanh, one batch tile."""
    x = x_ref[...]                                        # (TILE_B, D) f32

    h1 = jnp.dot(x, w1_ref[...], preferred_element_type=jnp.float32) + b1_ref[...]
    h1 = jnp.maximum(h1, 0.0)

    h2 = jnp.dot(h1, w2_ref[...], preferred_element_type=jnp.float32) + b2_ref[...]
    h2 = jnp.maximum(h2, 0.0)

    h3 = jnp.dot(h2, w3_ref[...], preferred_element_type=jnp.float32) + b3_ref[...]

    out_ref[...] = clip_ref[0, 0] * jnp.tanh(h3)          # clip scalar lives in SMEM


# ------------------------------ Wrapper ---------------------------------------

def mu_forward(x, params, clipped):
    """x: (B, dim_state) f32.  Returns (B, action_size) f32."""
    gamma, beta, w1, b1, w2, b2, w3, b3 = params
    B, D = x.shape
    H2 = w1.shape[1]
    H = w2.shape[1]
    A = w3.shape[1]

    # Batch tiling: tile size multiple of 8 (sublane), capped at TILE_B_MAX.
    tile_b = min(_round_up(max(B, 1), 8), TILE_B_MAX)
    B_pad = _round_up(B, tile_b)
    if B_pad != B:
        # Zero padding: padded rows contribute 0 to the stat sums, and their
        # outputs are sliced off at the end.
        x = jnp.pad(x, ((0, B_pad - B), (0, 0)))
    grid = (B_pad // tile_b,)

    # ---- Pass 1: batch statistics (training-mode BatchNorm uses batch stats) ----
    s_sum, s_sumsq = pl.pallas_call(
        bn_stats_kernel,
        out_shape=(jax.ShapeDtypeStruct((1, D), jnp.float32),
                   jax.ShapeDtypeStruct((1, D), jnp.float32)),
        grid=grid,
        in_specs=[pl.BlockSpec((tile_b, D), lambda i: (i, 0))],
        out_specs=(pl.BlockSpec((1, D), lambda i: (0, 0)),
                   pl.BlockSpec((1, D), lambda i: (0, 0))),
        compiler_params=pltpu.CompilerParams(dimension_semantics=("arbitrary",)),
    )(x)

    inv_n = 1.0 / float(B)                         # statistics over the real rows only
    mean = s_sum * inv_n                           # (1, D)
    var = s_sumsq * inv_n - mean * mean            # biased variance (PyTorch train mode)
    scale = gamma * jax.lax.rsqrt(var + BN_EPS)    # (1, D)

    # ---- Fold BatchNorm into the first linear layer (tiny, one-off) ----
    w1_eff = w1 * scale.reshape(D, 1)                      # (D, 2h)
    b1_eff = b1 + (beta - mean * scale) @ w1               # (1, 2h)

    clip_arr = jnp.full((1, 1), clipped, dtype=jnp.float32)

    cost = pl.CostEstimate(
        flops=2 * B_pad * (D * H2 + H2 * H + H * A),
        transcendentals=B_pad * A,
        bytes_accessed=4 * (B_pad * (D + A) + D * H2 + H2 + H2 * H + H + H * A + A),
    )

    def resident(shape):
        # Weights / biases: constant index map -> DMA'd once, stay VMEM-resident.
        return pl.BlockSpec(shape, lambda i: (0, 0))

    out = pl.pallas_call(
        mu_mlp_kernel,
        out_shape=jax.ShapeDtypeStruct((B_pad, A), jnp.float32),
        grid=grid,
        in_specs=[
            pl.BlockSpec(memory_space=pltpu.MemorySpace.SMEM),  # clipped scalar
            pl.BlockSpec((tile_b, D), lambda i: (i, 0)),        # x tile
            resident((D, H2)), resident((1, H2)),               # BN-folded W1, b1
            resident((H2, H)), resident((1, H)),                # W2, b2
            resident((H, A)), resident((1, A)),                 # W3, b3
        ],
        out_specs=pl.BlockSpec((tile_b, A), lambda i: (i, 0)),
        compiler_params=pltpu.CompilerParams(dimension_semantics=("parallel",)),
        cost_estimate=cost,
    )(clip_arr, x, w1_eff, b1_eff, w2, b2, w3, b3)

    return out[:B]


# ------------------------------ Test utils ------------------------------------

def init_params(key, dim_state, h, action_size):
    """Deterministic synthetic parameter init (shapes match the PyTorch module)."""
    ks = jax.random.split(key, 8)
    # BatchNorm1d affine params (non-trivial, to exercise the BN fold)
    gamma = 1.0 + 0.1 * jax.random.normal(ks[6], (1, dim_state), jnp.float32)
    beta = 0.1 * jax.random.normal(ks[7], (1, dim_state), jnp.float32)
    # Linear layers, stored as (in, out)
    w1 = jax.random.normal(ks[0], (dim_state, 2 * h), jnp.float32) * 0.1
    b1 = jax.random.normal(ks[1], (1, 2 * h), jnp.float32) * 0.01
    w2 = jax.random.normal(ks[2], (2 * h, h), jnp.float32) * 0.1
    b2 = jax.random.normal(ks[3], (1, h), jnp.float32) * 0.01
    w3 = jax.random.normal(ks[4], (h, action_size), jnp.float32) * 0.1
    b3 = jax.random.normal(ks[5], (1, action_size), jnp.float32) * 0.01
    return (gamma, beta, w1, b1, w2, b2, w3, b3)


def mu_reference(x, params, clipped):
    """Pure-JAX reference for sanity checking."""
    gamma, beta, w1, b1, w2, b2, w3, b3 = params
    mean = jnp.mean(x, axis=0, keepdims=True)
    var = jnp.mean((x - mean) ** 2, axis=0, keepdims=True)
    x_bn = (x - mean) / jnp.sqrt(var + BN_EPS) * gamma + beta
    h1 = jnp.maximum(x_bn @ w1 + b1, 0.0)
    h2 = jnp.maximum(h1 @ w2 + b2, 0.0)
    h3 = h2 @ w3 + b3
    return clipped * jnp.tanh(h3)


if __name__ == "__main__":
    # Small shapes implied by the module: config.h, config.action_size, dim_state
    dim_state = 16
    h = 32
    action_size = 8
    clipped = 2.0  # config.action_high

    key = jax.random.PRNGKey(0)
    kx, kp, kx2 = jax.random.split(key, 3)
    params = init_params(kp, dim_state, h, action_size)

    # Small batch (single tile, no padding).
    x = jax.random.normal(kx, (8, dim_state), jnp.float32)
    out = jax.block_until_ready(mu_forward(x, params, clipped))
    ref = mu_reference(x, params, clipped)
    assert out.shape == (8, action_size)
    assert jnp.allclose(out, ref, atol=1e-4, rtol=1e-4), "mismatch vs reference (B=8)"

    # Larger batch exercising the batch grid, resident weights and padding path.
    x2 = jax.random.normal(kx2, (3000, dim_state), jnp.float32)
    out2 = jax.block_until_ready(mu_forward(x2, params, clipped))
    ref2 = mu_reference(x2, params, clipped)
    assert out2.shape == (3000, action_size)
    assert jnp.allclose(out2, ref2, atol=1e-3, rtol=1e-3), "mismatch vs reference (B=3000)"

    # TODO(synk): BatchNorm running-stats (running_mean/var) update is a training
    # side effect of the PyTorch module and is not modeled; forward output matches.
    print("KERNEL_OK")
</pallas_src>

<mosaic_0001>
module attributes {stable_mosaic.version = 11 : i64} {
  func.func @bn_stats_kernel(%arg0: i32, %arg1: memref<8x16xf32, #tpu.memory_space<vmem>>, %arg2: memref<1x16xf32, #tpu.memory_space<vmem>>, %arg3: memref<1x16xf32, #tpu.memory_space<vmem>>) attributes {dimension_semantics = [#tpu.dimension_semantics<arbitrary>], iteration_bounds = array<i64: 1>, scalar_prefetch = 0 : i64, scratch_operands = 0 : i64, tpu.core_type = #tpu.core_type<tc>, window_params = [{transform_indices = @transform_0, window_bounds = array<i64: 8, 16>}, {pipeline_mode = #tpu.pipeline_mode<synchronous>, transform_indices = @transform_1, window_bounds = array<i64: 1, 16>}, {pipeline_mode = #tpu.pipeline_mode<synchronous>, transform_indices = @transform_2, window_bounds = array<i64: 1, 16>}]} {
    %c0_i32 = arith.constant 0 : i32
    %0 = arith.cmpi eq, %arg0, %c0_i32 : i32
    %1 = arith.extui %0 : i1 to i32
    %c0_i32_0 = arith.constant 0 : i32
    %2 = arith.cmpi ne, %1, %c0_i32_0 : i32
    scf.if %2 {
      %cst_11 = arith.constant 0.000000e+00 : f32
      %15 = vector.broadcast %cst_11 : f32 to vector<1x16xf32>
      %c0_12 = arith.constant 0 : index
      %c0_13 = arith.constant 0 : index
      %16 = vector.load %arg2[%c0_12, %c0_13] : memref<1x16xf32, #tpu.memory_space<vmem>>, vector<1x16xf32>
      tpu.vector_store %arg2[%c0_12, %c0_13], %15 {strides = array<i32>} : memref<1x16xf32, #tpu.memory_space<vmem>>, vector<1x16xf32>,
      %cst_14 = arith.constant 0.000000e+00 : f32
      %17 = vector.broadcast %cst_14 : f32 to vector<1x16xf32>
      %c0_15 = arith.constant 0 : index
      %c0_16 = arith.constant 0 : index
      %18 = vector.load %arg3[%c0_15, %c0_16] : memref<1x16xf32, #tpu.memory_space<vmem>>, vector<1x16xf32>
      tpu.vector_store %arg3[%c0_15, %c0_16], %17 {strides = array<i32>} : memref<1x16xf32, #tpu.memory_space<vmem>>, vector<1x16xf32>,
    } else {
    }
    %c0 = arith.constant 0 : index
    %c0_1 = arith.constant 0 : index
    %3 = vector.load %arg1[%c0, %c0_1] : memref<8x16xf32, #tpu.memory_space<vmem>>, vector<8x16xf32>
    %c0_2 = arith.constant 0 : index
    %c0_3 = arith.constant 0 : index
    %4 = vector.load %arg2[%c0_2, %c0_3] : memref<1x16xf32, #tpu.memory_space<vmem>>, vector<1x16xf32>
    %cst = arith.constant dense<0.000000e+00> : vector<16xf32>
    %5 = vector.multi_reduction <add>, %3, %cst [0] : vector<8x16xf32> to vector<16xf32>
    %6 = vector.shape_cast %5 : vector<16xf32> to vector<1x16xf32>
    %7 = arith.addf %4, %6 : vector<1x16xf32>
    %c0_4 = arith.constant 0 : index
    %c0_5 = arith.constant 0 : index
    %8 = vector.load %arg2[%c0_4, %c0_5] : memref<1x16xf32, #tpu.memory_space<vmem>>, vector<1x16xf32>
    tpu.vector_store %arg2[%c0_4, %c0_5], %7 {strides = array<i32>} : memref<1x16xf32, #tpu.memory_space<vmem>>, vector<1x16xf32>,
    %c0_6 = arith.constant 0 : index
    %c0_7 = arith.constant 0 : index
    %9 = vector.load %arg3[%c0_6, %c0_7] : memref<1x16xf32, #tpu.memory_space<vmem>>, vector<1x16xf32>
    %10 = arith.mulf %3, %3 : vector<8x16xf32>
    %cst_8 = arith.constant dense<0.000000e+00> : vector<16xf32>
    %11 = vector.multi_reduction <add>, %10, %cst_8 [0] : vector<8x16xf32> to vector<16xf32>
    %12 = vector.shape_cast %11 : vector<16xf32> to vector<1x16xf32>
    %13 = arith.addf %9, %12 : vector<1x16xf32>
    %c0_9 = arith.constant 0 : index
    %c0_10 = arith.constant 0 : index
    %14 = vector.load %arg3[%c0_9, %c0_10] : memref<1x16xf32, #tpu.memory_space<vmem>>, vector<1x16xf32>
    tpu.vector_store %arg3[%c0_9, %c0_10], %13 {strides = array<i32>} : memref<1x16xf32, #tpu.memory_space<vmem>>, vector<1x16xf32>,
    return
  }
  func.func @transform_0(%arg0: i32) -> (i32, i32) {
    %c0_i32 = arith.constant 0 : i32
    %c0_i32_0 = arith.constant 0 : i32
    return %arg0, %c0_i32 : i32, i32
  }
  func.func @transform_1(%arg0: i32) -> (i32, i32) {
    %c0_i32 = arith.constant 0 : i32
    %c0_i32_0 = arith.constant 0 : i32
    %c0_i32_1 = arith.constant 0 : i32
    return %c0_i32, %c0_i32_0 : i32, i32
  }
  func.func @transform_2(%arg0: i32) -> (i32, i32) {
    %c0_i32 = arith.constant 0 : i32
    %c0_i32_0 = arith.constant 0 : i32
    %c0_i32_1 = arith.constant 0 : i32
    return %c0_i32, %c0_i32_0 : i32, i32
  }
}

</mosaic_0001>

<llo_original>
// kernel: tpu_custom_call.1
$region0: #{tpu_custom_call.1}
  #allocation0 [shape = 'u32[]', space=smem, size = 0x4, offset = 0x4, fixed_abs, tag = 'smem constant byte address 0x4 - core index']
  #allocation1 [shape = 'u32[144,128]{1,0:T(1,128)}', space=vmem, size = 0x12000, scoped, tag = 'internal scratch']
  %s0 = inlined_call_operand.hbm [shape: f32[8,16], index: 0, kind: input, shape index: {}]
  %s1 = inlined_call_operand.hbm [shape: f32[1,16], index: 1, kind: output, shape index: {0}]
  %s2 = inlined_call_operand.hbm [shape: f32[1,16], index: 2, kind: output, shape index: {1}]
  %3 = xla_tuple %s1, %s2
  %s4 = sld [smem:[#allocation0]]
  $region30: #{tpu_custom_call.1} parent=0
    _
  %s6 = ssub.s32 1, %s4
  %s7 = scalar_select 0, %s6, %s4
  $region1: #{tpu_custom_call.1} parent=0
    #allocation2 [shape = 'u8[4096]{0}', space=vmem, size = 0x1000, scoped, tag = 'input window, operand 0, single buffered']
    #allocation3 [shape = 's32[1]{0}', space=sflag, size = 0x4, scoped, tag = 'scoped memory for tpu_custom_call.1']
    #allocation4 [shape = 's32[1]{0}', space=sflag, size = 0x4, scoped, tag = 'scoped memory for tpu_custom_call.1']
    #allocation5 [shape = 'u8[512]{0}', space=vmem, size = 0x400, scoped, tag = 'output window, operand 0, single buffered']
    #allocation6 [shape = 'u8[512]{0}', space=vmem, size = 0x400, scoped, tag = 'output window, operand 1, single buffered']
    #allocation7 [shape = 's32[1]{0}', space=sflag, size = 0x4, scoped, tag = 'scoped memory for tpu_custom_call.1']
    %8 = vsyncpa [#allocation3], 0
    %9 = vsyncpa [#allocation4], 0
    %10 = vsyncpa [#allocation7], 0
    // Predicated region
    $region2: #{tpu_custom_call.1} parent=1 // pred_check
      _
    $region3: #{tpu_custom_call.1} parent=1 // pred_check_branch
      %12 = sbr.rel (0) target = $region5
    $region4: #{tpu_custom_call.1} parent=1 // pred_region
      %s14 = ssub.s32 128, 128
      %15 = vsyncadd [#allocation3], %s14
      %s17 = sshll.u32 [#allocation2], 4
      %s18 = int_to_ptr.vmem [resolvable:$true] %s17
      %20 = dma.hbm_to_vmem [thread:$0]  %s0, 128, %s18, [#allocation3]
    $region5: #{tpu_custom_call.1} parent=1 // pred_fallthru
      _
    // Predicated region
    $region6: #{tpu_custom_call.1} parent=1 // pred_check
      _
    $region7: #{tpu_custom_call.1} parent=1 // pred_check_branch
      %22 = sbr.rel (0) target = $region9
    $region8: #{tpu_custom_call.1} parent=1 // pred_region
      %23 = dma.done [#allocation3], 128
    $region9: #{tpu_custom_call.1} parent=1 // pred_fallthru
      _
    %p24 = scmp.eq.s32.totalorder 0, 0
    // Predicated region
    $region10: #{tpu_custom_call.1} parent=1 // pred_check
      %p25 = pneg %p24
    $region11: #{tpu_custom_call.1} parent=1 // pred_check_branch
      %27 = sbr.rel (%p25) target = $region13
    $region12: #{tpu_custom_call.1} parent=1 // pred_region
      %vm28 = vcmask 122880
      %29 = vst.msk [vmem:[#allocation5] sm:$0x1] %vm28, 0.0
      %30 = vst.msk [vmem:[#allocation6] sm:$0x1] %vm28, 0.0
    $region13: #{tpu_custom_call.1} parent=1 // pred_fallthru
      _
    %v31 = vld [vmem:[#allocation2] sm:$0xff]
    %v32 = vld [vmem:[#allocation5] sm:$0x1]
    %vm33 = vcmask 130048
    %v34 = vsel %vm33, %v31, 0.0
    %v35 = vrot.slane %v34, 4
    %v36 = vadd.f32 %v34, %v35
    %v37 = vrot.slane %v36, 2
    %v38 = vadd.f32 %v36, %v37
    %v39 = vrot.slane %v38, 1
    %v40 = vadd.f32 %v38, %v39
    %v41 = vadd.f32 %v32, %v40
    %vm42 = vcmask 122880
    %43 = vst.msk [vmem:[#allocation5] sm:$0x1] %vm42, %v41
    %v44 = vld [vmem:[#allocation6] sm:$0x1]
    %v45 = vmul.f32 %v31, %v31
    %v46 = vsel %vm33, %v45, 0.0
    %v47 = vrot.slane %v46, 4
    %v48 = vadd.f32 %v46, %v47
    %v49 = vrot.slane %v48, 2
    %v50 = vadd.f32 %v48, %v49
    %v51 = vrot.slane %v50, 1
    %v52 = vadd.f32 %v50, %v51
    %v53 = vadd.f32 %v44, %v52
    %54 = vst.msk [vmem:[#allocation6] sm:$0x1] %vm42, %v53
    // Predicated region
    $region14: #{tpu_custom_call.1} parent=1 // pred_check
      _
    $region15: #{tpu_custom_call.1} parent=1 // pred_check_branch
      %56 = sbr.rel (0) target = $region17
    $region16: #{tpu_custom_call.1} parent=1 // pred_region
      %s58 = ssub.s32 16, 16
      %59 = vsyncadd [#allocation4], %s58
      %s61 = sshll.u32 [#allocation5], 4
      %s62 = int_to_ptr.vmem [resolvable:$true] %s61
      %64 = dma.vmem_to_hbm [thread:$0]  %s62, 16, %s1, [#allocation4]
    $region17: #{tpu_custom_call.1} parent=1 // pred_fallthru
      _
    // Predicated region
    $region18: #{tpu_custom_call.1} parent=1 // pred_check
      _
    $region19: #{tpu_custom_call.1} parent=1 // pred_check_branch
      %66 = sbr.rel (0) target = $region21
    $region20: #{tpu_custom_call.1} parent=1 // pred_region
      %s68 = ssub.s32 16, 16
      %69 = vsyncadd [#allocation7], %s68
      %s71 = sshll.u32 [#allocation6], 4
      %s72 = int_to_ptr.vmem [resolvable:$true] %s71
      %74 = dma.vmem_to_hbm [thread:$0]  %s72, 16, %s2, [#allocation7]
    $region21: #{tpu_custom_call.1} parent=1 // pred_fallthru
      _
    // Predicated region
    $region22: #{tpu_custom_call.1} parent=1 // pred_check
      _
    $region23: #{tpu_custom_call.1} parent=1 // pred_check_branch
      %76 = sbr.rel (0) target = $region25
    $region24: #{tpu_custom_call.1} parent=1 // pred_region
      %77 = dma.done [#allocation4], 16
    $region25: #{tpu_custom_call.1} parent=1 // pred_fallthru
      _
    // Predicated region
    $region26: #{tpu_custom_call.1} parent=1 // pred_check
      _
    $region27: #{tpu_custom_call.1} parent=1 // pred_check_branch
      %79 = sbr.rel (0) target = $region29
    $region28: #{tpu_custom_call.1} parent=1 // pred_region
      %80 = dma.done [#allocation7], 16
    $region29: #{tpu_custom_call.1} parent=1 // pred_fallthru
      _
    %81 = vsyncpa [#allocation3], 1
    %82 = vsyncpa [#allocation4], 1
    %83 = vsyncpa [#allocation7], 1

</llo_original>
